<compile_context>
chip_gen: v6e
topology: v6e:2x2x1
jax: 0.10.0
libtpu: 0.0.40
codegen_flags: <defaults>
</compile_context>

<pallas_src>
import functools

import jax
import jax.numpy as jnp
from jax.experimental import pallas as pl
from jax.experimental.pallas import tpu as pltpu

LANES = 128      # vreg lane width
SUBLANES = 8     # f32 vreg sublane count


def _wtss_partial_kernel(thr_ref, x_ref, t_ref, o_ref, tp_acc, p_acc, t_acc,
                         *, tgt_is_int):
    """Accumulates tp / sum(pred) / sum(tgt) over one (block_rows, 128) tile."""
    i = pl.program_id(1)          # row-block index within this split

    @pl.when(i == 0)
    def _init():
        tp_acc[...] = jnp.zeros_like(tp_acc)
        p_acc[...] = jnp.zeros_like(p_acc)
        t_acc[...] = jnp.zeros_like(t_acc)

    x = x_ref[...]                               # native dtype, no widening
    t = t_ref[...]
    thr = thr_ref[0].astype(x.dtype)             # runtime scalar from SMEM

    pred = x >= thr                              # PyTorch: 0 if y < thr else 1
    if tgt_is_int:
        tgt = t >= jnp.asarray(1, dtype=t.dtype)
    else:
        tgt = t >= jnp.asarray(0.5, dtype=t.dtype)
    tp = jnp.logical_and(pred, tgt)

    # Pure-VPU accumulation into (8, 128) vector accumulators: group the tile
    # into (k, 8, 128) vreg slabs and add them elementwise.  The cross-lane /
    # cross-sublane reduction happens once, in the wrapper epilogue.
    k = x.shape[0] // SUBLANES
    f32 = jnp.float32
    p_acc[...] += jnp.sum(pred.astype(f32).reshape(k, SUBLANES, LANES), axis=0)
    t_acc[...] += jnp.sum(tgt.astype(f32).reshape(k, SUBLANES, LANES), axis=0)
    tp_acc[...] += jnp.sum(tp.astype(f32).reshape(k, SUBLANES, LANES), axis=0)

    # Once per split: dump the three (8, 128) accumulators into the output.
    @pl.when(i == pl.num_programs(1) - 1)
    def _epilogue():
        o_ref[0 * SUBLANES:1 * SUBLANES, :] = tp_acc[...]
        o_ref[1 * SUBLANES:2 * SUBLANES, :] = p_acc[...]
        o_ref[2 * SUBLANES:3 * SUBLANES, :] = t_acc[...]


def _binarize(t, tgt_is_int):
    if tgt_is_int:
        return t >= jnp.asarray(1, dtype=t.dtype)
    return t >= jnp.asarray(0.5, dtype=t.dtype)


def _default_num_splits():
    # Two TensorCores per chip only on v7x; v5e/v6e are single-core where a
    # "parallel" split only adds prologue/epilogue overhead.
    try:
        kind = jax.devices()[0].device_kind.lower()
        if "v7" in kind or "7x" in kind:
            return 2
    except Exception:
        pass
    return 1


def wtss_loss(inputs, targets, alpha: float = 1.0, threshold: float = 0.5, *,
              block_rows: int = 2048, num_splits=None):
    """inputs: (N,) probabilities, targets: (N,) binary labels -> scalar f32 loss."""
    n = int(inputs.shape[0])
    alpha = float(alpha)
    if num_splits is None:
        num_splits = _default_num_splits()

    if targets.dtype == jnp.bool_:
        targets = targets.astype(jnp.int8)      # keep the stream narrow
    tgt_is_int = bool(jnp.issubdtype(targets.dtype, jnp.integer))

    # Row alignment: 8 sublanes for 32-bit streams; packed dtypes tile deeper.
    itemsize = max(1, min(jnp.dtype(inputs.dtype).itemsize,
                          jnp.dtype(targets.dtype).itemsize))
    row_align = SUBLANES * max(1, 4 // itemsize)   # f32->8, bf16->16, i8->32

    rows, tail = divmod(n, LANES)

    block_rows = max(row_align, (int(block_rows) // row_align) * row_align)
    block_rows = min(block_rows, (rows // row_align) * row_align)
    use_kernel = block_rows >= row_align

    kernel_rows = 0
    if use_kernel:
        if num_splits > 1:
            # Each core should get >= 2 blocks so its pipeline can prefetch.
            per_split = ((rows // (2 * num_splits)) // row_align) * row_align
            if per_split >= row_align:
                block_rows = min(block_rows, per_split)
            else:
                num_splits = 1
        nblocks = rows // block_rows
        if num_splits > 1:
            nblocks = (nblocks // num_splits) * num_splits
        blocks_per_split = nblocks // num_splits
        kernel_rows = nblocks * block_rows

    n_kernel = kernel_rows * LANES              # elements covered by the kernel
    thr_arr = jnp.asarray([threshold], dtype=jnp.float32)

    tp = jnp.float32(0.0)
    p_sum = jnp.float32(0.0)
    t_sum = jnp.float32(0.0)

    if use_kernel:
        if tail == 0:
            x2 = inputs.reshape(rows, LANES)    # free bitcast, no HBM copy
            t2 = targets.reshape(rows, LANES)
        else:
            # N not lane-aligned: the prefix slice materializes one copy.
            # Feed a multiple-of-128 N to avoid it entirely.
            x2 = inputs[: rows * LANES].reshape(rows, LANES)
            t2 = targets[: rows * LANES].reshape(rows, LANES)

        kernel = functools.partial(_wtss_partial_kernel, tgt_is_int=tgt_is_int)
        idx = lambda c, i: (c * blocks_per_split + i, 0)

        partials = pl.pallas_call(
            kernel,
            out_shape=jax.ShapeDtypeStruct(
                (num_splits * 3 * SUBLANES, LANES), jnp.float32),
            grid_spec=pltpu.PrefetchScalarGridSpec(
                num_scalar_prefetch=0,
                grid=(num_splits, blocks_per_split),
                in_specs=[
                    pl.BlockSpec(memory_space=pltpu.MemorySpace.SMEM),  # threshold
                    pl.BlockSpec((block_rows, LANES), idx),
                    pl.BlockSpec((block_rows, LANES), idx),
                ],
                out_specs=pl.BlockSpec((3 * SUBLANES, LANES),
                                       lambda c, i: (c, 0)),
                scratch_shapes=[pltpu.VMEM((SUBLANES, LANES), jnp.float32)] * 3,
            ),
            compiler_params=pltpu.CompilerParams(
                dimension_semantics=("parallel", "arbitrary")),
        )(thr_arr, x2, t2)

        parts = partials.reshape(num_splits, 3, SUBLANES, LANES)
        # Final cross-lane reduce (once).  f32 counts are exact up to ~2^24.
        tp = jnp.sum(parts[:, 0])
        p_sum = jnp.sum(parts[:, 1])
        t_sum = jnp.sum(parts[:, 2])

    # Remainder (< block_rows rows + <128-element tail): tiny, plain jnp.
    if n_kernel < n:
        xr = inputs[n_kernel:]
        tr = targets[n_kernel:]
        pred_r = xr >= jnp.asarray(threshold, dtype=xr.dtype)
        tgt_r = _binarize(tr, tgt_is_int)
        tp = tp + jnp.sum(jnp.logical_and(pred_r, tgt_r).astype(jnp.float32))
        p_sum = p_sum + jnp.sum(pred_r.astype(jnp.float32))
        t_sum = t_sum + jnp.sum(tgt_r.astype(jnp.float32))

    # Derive the confusion-matrix counts from (tp, sum(pred), sum(tgt), N).
    fn = t_sum - tp
    fp = p_sum - tp
    tn = jnp.float32(n) - p_sum - t_sum + tp
    loss = 1.0 - 2.0 / (alpha + 1.0) * (alpha * (fn / (tp + fn)) + fp / (tn + fp))
    return loss


def _reference(inputs, targets, alpha=1.0, threshold=0.5):
    pred = (inputs >= threshold).astype(jnp.float32)
    tgt = (targets.astype(jnp.float32) >= 0.5).astype(jnp.float32)
    tp = jnp.sum(pred * tgt)
    fn = jnp.sum((1 - pred) * tgt)
    fp = jnp.sum(pred * (1 - tgt))
    tn = jnp.sum((1 - pred) * (1 - tgt))
    return 1.0 - 2.0 / (alpha + 1.0) * (alpha * (fn / (tp + fn)) + fp / (tn + fp))


if __name__ == "__main__":
    key = jax.random.PRNGKey(0)
    k1, k2, k3, k4, k5, k6 = jax.random.split(key, 6)
    alpha, threshold = 1.5, 0.45

    # 1) Lane-aligned N: free reshape, single-block accumulation.
    n1 = 2048
    x1 = jax.random.uniform(k1, (n1,), dtype=jnp.float32)
    y1 = jax.random.bernoulli(k2, 0.5, (n1,)).astype(jnp.float32)
    loss1 = jax.block_until_ready(
        wtss_loss(x1, y1, alpha=alpha, threshold=threshold))
    ref1 = _reference(x1, y1, alpha=alpha, threshold=threshold)
    assert jnp.allclose(loss1, ref1, atol=1e-5, rtol=1e-5), (loss1, ref1)

    # 2) Ragged N: kernel covers the block-aligned bulk, wrapper reduces the
    #    small remainder + tail.
    n2 = 5000
    x2 = jax.random.uniform(k3, (n2,), dtype=jnp.float32)
    y2 = jax.random.bernoulli(k4, 0.3, (n2,)).astype(jnp.float32)
    loss2 = jax.block_until_ready(
        wtss_loss(x2, y2, alpha=alpha, threshold=threshold))
    ref2 = _reference(x2, y2, alpha=alpha, threshold=threshold)
    assert jnp.allclose(loss2, ref2, atol=1e-5, rtol=1e-5), (loss2, ref2)

    # 3) Multi-block streaming accumulation (and a 2-way TensorCore split on
    #    dual-core parts).
    n3 = 262144
    x3 = jax.random.uniform(k5, (n3,), dtype=jnp.float32)
    y3 = jax.random.bernoulli(k6, 0.4, (n3,)).astype(jnp.float32)
    loss3 = jax.block_until_ready(
        wtss_loss(x3, y3, alpha=alpha, threshold=threshold, block_rows=512))
    ref3 = _reference(x3, y3, alpha=alpha, threshold=threshold)
    assert jnp.allclose(loss3, ref3, atol=1e-5, rtol=1e-5), (loss3, ref3)

    print("KERNEL_OK")
</pallas_src>

<mosaic_0001>
module attributes {stable_mosaic.version = 11 : i64} {
  func.func @_wtss_partial_kernel(%arg0: i32, %arg1: i32, %arg2: memref<1xf32, #tpu.memory_space<smem>>, %arg3: memref<16x128xf32, #tpu.memory_space<vmem>>, %arg4: memref<16x128xf32, #tpu.memory_space<vmem>>, %arg5: memref<24x128xf32, #tpu.memory_space<vmem>>, %arg6: memref<8x128xf32, #tpu.memory_space<vmem>>, %arg7: memref<8x128xf32, #tpu.memory_space<vmem>>, %arg8: memref<8x128xf32, #tpu.memory_space<vmem>>) attributes {dimension_semantics = [#tpu.dimension_semantics<parallel>, #tpu.dimension_semantics<arbitrary>], iteration_bounds = array<i64: 1, 1>, scalar_prefetch = 0 : i64, scratch_operands = 3 : i64, tpu.core_type = #tpu.core_type<tc>, window_params = [{transform_indices = @transform_0, window_bounds = array<i64: 1>}, {transform_indices = @transform_1, window_bounds = array<i64: 16, 128>}, {transform_indices = @transform_2, window_bounds = array<i64: 16, 128>}, {transform_indices = @transform_3, window_bounds = array<i64: 24, 128>}]} {
    %c0_i32 = arith.constant 0 : i32
    %0 = arith.cmpi eq, %arg1, %c0_i32 : i32
    %1 = arith.extui %0 : i1 to i32
    %c0_i32_0 = arith.constant 0 : i32
    %2 = arith.cmpi ne, %1, %c0_i32_0 : i32
    scf.if %2 {
      %cst_22 = arith.constant 0.000000e+00 : f32
      %35 = vector.broadcast %cst_22 : f32 to vector<8x128xf32>
      %c0_23 = arith.constant 0 : index
      %c0_24 = arith.constant 0 : index
      %36 = vector.load %arg6[%c0_23, %c0_24] : memref<8x128xf32, #tpu.memory_space<vmem>>, vector<8x128xf32>
      tpu.vector_store %arg6[%c0_23, %c0_24], %35 {strides = array<i32>} : memref<8x128xf32, #tpu.memory_space<vmem>>, vector<8x128xf32>,
      %cst_25 = arith.constant 0.000000e+00 : f32
      %37 = vector.broadcast %cst_25 : f32 to vector<8x128xf32>
      %c0_26 = arith.constant 0 : index
      %c0_27 = arith.constant 0 : index
      %38 = vector.load %arg7[%c0_26, %c0_27] : memref<8x128xf32, #tpu.memory_space<vmem>>, vector<8x128xf32>
      tpu.vector_store %arg7[%c0_26, %c0_27], %37 {strides = array<i32>} : memref<8x128xf32, #tpu.memory_space<vmem>>, vector<8x128xf32>,
      %cst_28 = arith.constant 0.000000e+00 : f32
      %39 = vector.broadcast %cst_28 : f32 to vector<8x128xf32>
      %c0_29 = arith.constant 0 : index
      %c0_30 = arith.constant 0 : index
      %40 = vector.load %arg8[%c0_29, %c0_30] : memref<8x128xf32, #tpu.memory_space<vmem>>, vector<8x128xf32>
      tpu.vector_store %arg8[%c0_29, %c0_30], %39 {strides = array<i32>} : memref<8x128xf32, #tpu.memory_space<vmem>>, vector<8x128xf32>,
    } else {
    }
    %c0 = arith.constant 0 : index
    %c0_1 = arith.constant 0 : index
    %3 = vector.load %arg3[%c0, %c0_1] : memref<16x128xf32, #tpu.memory_space<vmem>>, vector<16x128xf32>
    %c0_2 = arith.constant 0 : index
    %c0_3 = arith.constant 0 : index
    %4 = vector.load %arg4[%c0_2, %c0_3] : memref<16x128xf32, #tpu.memory_space<vmem>>, vector<16x128xf32>
    %c0_4 = arith.constant 0 : index
    %5 = memref.load %arg2[%c0_4] : memref<1xf32, #tpu.memory_space<smem>>
    %6 = vector.broadcast %5 : f32 to vector<16x128xf32>
    %7 = arith.cmpf oge, %3, %6 : vector<16x128xf32>
    %cst = arith.constant 5.000000e-01 : f32
    %8 = vector.broadcast %cst : f32 to vector<16x128xf32>
    %9 = arith.cmpf oge, %4, %8 : vector<16x128xf32>
    %10 = arith.andi %7, %9 : vector<16x128xi1>
    %c0_5 = arith.constant 0 : index
    %c0_6 = arith.constant 0 : index
    %11 = vector.load %arg7[%c0_5, %c0_6] : memref<8x128xf32, #tpu.memory_space<vmem>>, vector<8x128xf32>
    %12 = arith.extui %7 : vector<16x128xi1> to vector<16x128xi32>
    %13 = arith.sitofp %12 : vector<16x128xi32> to vector<16x128xf32>
    %14 = vector.shape_cast %13 : vector<16x128xf32> to vector<2x8x128xf32>
    %cst_7 = arith.constant dense<0.000000e+00> : vector<8x128xf32>
    %15 = vector.multi_reduction <add>, %14, %cst_7 [0] : vector<2x8x128xf32> to vector<8x128xf32>
    %16 = arith.addf %11, %15 : vector<8x128xf32>
    %c0_8 = arith.constant 0 : index
    %c0_9 = arith.constant 0 : index
    %17 = vector.load %arg7[%c0_8, %c0_9] : memref<8x128xf32, #tpu.memory_space<vmem>>, vector<8x128xf32>
    tpu.vector_store %arg7[%c0_8, %c0_9], %16 {strides = array<i32>} : memref<8x128xf32, #tpu.memory_space<vmem>>, vector<8x128xf32>,
    %c0_10 = arith.constant 0 : index
    %c0_11 = arith.constant 0 : index
    %18 = vector.load %arg8[%c0_10, %c0_11] : memref<8x128xf32, #tpu.memory_space<vmem>>, vector<8x128xf32>
    %19 = arith.extui %9 : vector<16x128xi1> to vector<16x128xi32>
    %20 = arith.sitofp %19 : vector<16x128xi32> to vector<16x128xf32>
    %21 = vector.shape_cast %20 : vector<16x128xf32> to vector<2x8x128xf32>
    %cst_12 = arith.constant dense<0.000000e+00> : vector<8x128xf32>
    %22 = vector.multi_reduction <add>, %21, %cst_12 [0] : vector<2x8x128xf32> to vector<8x128xf32>
    %23 = arith.addf %18, %22 : vector<8x128xf32>
    %c0_13 = arith.constant 0 : index
    %c0_14 = arith.constant 0 : index
    %24 = vector.load %arg8[%c0_13, %c0_14] : memref<8x128xf32, #tpu.memory_space<vmem>>, vector<8x128xf32>
    tpu.vector_store %arg8[%c0_13, %c0_14], %23 {strides = array<i32>} : memref<8x128xf32, #tpu.memory_space<vmem>>, vector<8x128xf32>,
    %c0_15 = arith.constant 0 : index
    %c0_16 = arith.constant 0 : index
    %25 = vector.load %arg6[%c0_15, %c0_16] : memref<8x128xf32, #tpu.memory_space<vmem>>, vector<8x128xf32>
    %26 = arith.extui %10 : vector<16x128xi1> to vector<16x128xi32>
    %27 = arith.sitofp %26 : vector<16x128xi32> to vector<16x128xf32>
    %28 = vector.shape_cast %27 : vector<16x128xf32> to vector<2x8x128xf32>
    %cst_17 = arith.constant dense<0.000000e+00> : vector<8x128xf32>
    %29 = vector.multi_reduction <add>, %28, %cst_17 [0] : vector<2x8x128xf32> to vector<8x128xf32>
    %30 = arith.addf %25, %29 : vector<8x128xf32>
    %c0_18 = arith.constant 0 : index
    %c0_19 = arith.constant 0 : index
    %31 = vector.load %arg6[%c0_18, %c0_19] : memref<8x128xf32, #tpu.memory_space<vmem>>, vector<8x128xf32>
    tpu.vector_store %arg6[%c0_18, %c0_19], %30 {strides = array<i32>} : memref<8x128xf32, #tpu.memory_space<vmem>>, vector<8x128xf32>,
    %c0_i32_20 = arith.constant 0 : i32
    %32 = arith.cmpi eq, %arg1, %c0_i32_20 : i32
    %33 = arith.extui %32 : i1 to i32
    %c0_i32_21 = arith.constant 0 : i32
    %34 = arith.cmpi ne, %33, %c0_i32_21 : i32
    scf.if %34 {
      %c0_22 = arith.constant 0 : index
      %c0_23 = arith.constant 0 : index
      %35 = vector.load %arg6[%c0_22, %c0_23] : memref<8x128xf32, #tpu.memory_space<vmem>>, vector<8x128xf32>
      %c0_24 = arith.constant 0 : index
      %c0_25 = arith.constant 0 : index
      %36 = vector.load %arg5[%c0_24, %c0_25] : memref<24x128xf32, #tpu.memory_space<vmem>>, vector<8x128xf32>
      tpu.vector_store %arg5[%c0_24, %c0_25], %35 {strides = array<i32>} : memref<24x128xf32, #tpu.memory_space<vmem>>, vector<8x128xf32>,
      %c0_26 = arith.constant 0 : index
      %c0_27 = arith.constant 0 : index
      %37 = vector.load %arg7[%c0_26, %c0_27] : memref<8x128xf32, #tpu.memory_space<vmem>>, vector<8x128xf32>
      %c8 = arith.constant 8 : index
      %c0_28 = arith.constant 0 : index
      %38 = vector.load %arg5[%c8, %c0_28] : memref<24x128xf32, #tpu.memory_space<vmem>>, vector<8x128xf32>
      tpu.vector_store %arg5[%c8, %c0_28], %37 {strides = array<i32>} : memref<24x128xf32, #tpu.memory_space<vmem>>, vector<8x128xf32>,
      %c0_29 = arith.constant 0 : index
      %c0_30 = arith.constant 0 : index
      %39 = vector.load %arg8[%c0_29, %c0_30] : memref<8x128xf32, #tpu.memory_space<vmem>>, vector<8x128xf32>
      %c16 = arith.constant 16 : index
      %c0_31 = arith.constant 0 : index
      %40 = vector.load %arg5[%c16, %c0_31] : memref<24x128xf32, #tpu.memory_space<vmem>>, vector<8x128xf32>
      tpu.vector_store %arg5[%c16, %c0_31], %39 {strides = array<i32>} : memref<24x128xf32, #tpu.memory_space<vmem>>, vector<8x128xf32>,
    } else {
    }
    return
  }
  func.func @transform_0(%arg0: i32, %arg1: i32) -> i32 {
    %c0_i32 = arith.constant 0 : i32
    %c0_i32_0 = arith.constant 0 : i32
    return %c0_i32 : i32
  }
  func.func @transform_1(%arg0: i32, %arg1: i32) -> (i32, i32) {
    %c1_i32 = arith.constant 1 : i32
    %0 = arith.muli %arg0, %c1_i32 : i32
    %1 = arith.addi %0, %arg1 : i32
    %c0_i32 = arith.constant 0 : i32
    %c0_i32_0 = arith.constant 0 : i32
    return %1, %c0_i32 : i32, i32
  }
  func.func @transform_2(%arg0: i32, %arg1: i32) -> (i32, i32) {
    %c1_i32 = arith.constant 1 : i32
    %0 = arith.muli %arg0, %c1_i32 : i32
    %1 = arith.addi %0, %arg1 : i32
    %c0_i32 = arith.constant 0 : i32
    %c0_i32_0 = arith.constant 0 : i32
    return %1, %c0_i32 : i32, i32
  }
  func.func @transform_3(%arg0: i32, %arg1: i32) -> (i32, i32) {
    %c0_i32 = arith.constant 0 : i32
    %c0_i32_0 = arith.constant 0 : i32
    return %arg0, %c0_i32 : i32, i32
  }
}

</mosaic_0001>

<llo_original>
// kernel: tpu_custom_call.1
$region0: #{tpu_custom_call.1}
  #allocation0 [shape = 'u32[]', space=smem, size = 0x4, offset = 0x4, fixed_abs, tag = 'smem constant byte address 0x4 - core index']
  #allocation1 [shape = 'u32[144,128]{1,0:T(1,128)}', space=vmem, size = 0x12000, scoped, tag = 'internal scratch']
  #allocation2 [shape = 'f32[8,128]{1,0:T(8,128)}', space=vmem, size = 0x1000, scoped, tag = 'scratch operand']
  #allocation3 [shape = 'f32[8,128]{1,0:T(8,128)}', space=vmem, size = 0x1000, scoped, tag = 'scratch operand']
  #allocation4 [shape = 'f32[8,128]{1,0:T(8,128)}', space=vmem, size = 0x1000, scoped, tag = 'scratch operand']
  #allocation5 [shape = 'f32[1]{0:T(128)S(6)}', space=smem, size = 0x200, scoped, tag = 'scoped memory for tpu_custom_call.1']
  %s0 = inlined_call_operand.<no memory space> [shape: f32[1], index: 0, kind: input, shape index: {}]
  %s1 = inlined_call_operand.hbm [shape: f32[16,128], index: 1, kind: input, shape index: {}]
  %s2 = inlined_call_operand.hbm [shape: f32[16,128], index: 2, kind: input, shape index: {}]
  %s3 = inlined_call_operand.hbm [shape: f32[24,128], index: 3, kind: output, shape index: {}]
  %s4 = sld [smem:[#allocation0]]
  $region38: #{tpu_custom_call.1} parent=0
    _
  %s6 = ssub.s32 1, %s4
  %s7 = scalar_select 0, %s6, %s4
  %8 = sst [smem:[#allocation5]] %s0
  $region1: #{tpu_custom_call.1} parent=0
    #allocation6 [shape = 'u8[8192]{0}', space=vmem, size = 0x2000, scoped, tag = 'input window, operand 1, single buffered']
    #allocation7 [shape = 's32[1]{0}', space=sflag, size = 0x4, scoped, tag = 'scoped memory for tpu_custom_call.1']
    #allocation8 [shape = 's32[1]{0}', space=sflag, size = 0x4, scoped, tag = 'scoped memory for tpu_custom_call.1']
    #allocation9 [shape = 'u8[8192]{0}', space=vmem, size = 0x2000, scoped, tag = 'input window, operand 2, single buffered']
    #allocation10 [shape = 's32[1]{0}', space=sflag, size = 0x4, scoped, tag = 'scoped memory for tpu_custom_call.1']
    #allocation11 [shape = 'u8[12288]{0}', space=vmem, size = 0x3000, scoped, tag = 'output window, operand 0, single buffered']
    %9 = vsyncpa [#allocation7], 0
    %10 = vsyncpa [#allocation10], 0
    %11 = vsyncpa [#allocation8], 0
    // Predicated region
    $region2: #{tpu_custom_call.1} parent=1 // pred_check
      _
    $region3: #{tpu_custom_call.1} parent=1 // pred_check_branch
      %13 = sbr.rel (0) target = $region5
    $region4: #{tpu_custom_call.1} parent=1 // pred_region
      _
    $region5: #{tpu_custom_call.1} parent=1 // pred_fallthru
      _
    // Predicated region
    $region6: #{tpu_custom_call.1} parent=1 // pred_check
      _
    $region7: #{tpu_custom_call.1} parent=1 // pred_check_branch
      %15 = sbr.rel (0) target = $region9
    $region8: #{tpu_custom_call.1} parent=1 // pred_region
      %s16 = sadd.s32 0, 0
      %s17 = smul.u32 2, %s16
      %s19 = ssub.s32 256, 256
      %20 = vsyncadd [#allocation7], %s19
      %s21 = smul.addr %s17, 128
      %s22 = scalar_lea.hbm %s1, %s21
      %s23 = sshll.u32 [#allocation6], 4
      %s24 = int_to_ptr.vmem [resolvable:$true] %s23
      %29 = dma.hbm_to_vmem [thread:$0]  %s22, 256, %s24, [#allocation7], 128, 128, 8
    $region9: #{tpu_custom_call.1} parent=1 // pred_fallthru
      _
    // Predicated region
    $region10: #{tpu_custom_call.1} parent=1 // pred_check
      _
    $region11: #{tpu_custom_call.1} parent=1 // pred_check_branch
      %31 = sbr.rel (0) target = $region13
    $region12: #{tpu_custom_call.1} parent=1 // pred_region
      %s32 = sadd.s32 0, 0
      %s33 = smul.u32 2, %s32
      %s35 = ssub.s32 256, 256
      %36 = vsyncadd [#allocation10], %s35
      %s37 = smul.addr %s33, 128
      %s38 = scalar_lea.hbm %s2, %s37
      %s39 = sshll.u32 [#allocation9], 4
      %s40 = int_to_ptr.vmem [resolvable:$true] %s39
      %45 = dma.hbm_to_vmem [thread:$0]  %s38, 256, %s40, [#allocation10], 128, 128, 8
    $region13: #{tpu_custom_call.1} parent=1 // pred_fallthru
      _
    // Predicated region
    $region14: #{tpu_custom_call.1} parent=1 // pred_check
      _
    $region15: #{tpu_custom_call.1} parent=1 // pred_check_branch
      %47 = sbr.rel (0) target = $region17
    $region16: #{tpu_custom_call.1} parent=1 // pred_region
      %48 = dma.done [#allocation7], 256
    $region17: #{tpu_custom_call.1} parent=1 // pred_fallthru
      _
    // Predicated region
    $region18: #{tpu_custom_call.1} parent=1 // pred_check
      _
    $region19: #{tpu_custom_call.1} parent=1 // pred_check_branch
      %50 = sbr.rel (0) target = $region21
    $region20: #{tpu_custom_call.1} parent=1 // pred_region
      %51 = dma.done [#allocation10], 256
    $region21: #{tpu_custom_call.1} parent=1 // pred_fallthru
      _
    %s52 = sadd.s32 0, 0
    %s53 = smul.u32 2, %s52
    %s54 = sadd.s32 0, 0
    %s55 = smul.u32 2, %s54
    %p56 = scmp.eq.s32.totalorder 0, 0
    // Predicated region
    $region22: #{tpu_custom_call.1} parent=1 // pred_check
      %p57 = pneg %p56
    $region23: #{tpu_custom_call.1} parent=1 // pred_check_branch
      %59 = sbr.rel (%p57) target = $region25
    $region24: #{tpu_custom_call.1} parent=1 // pred_region
      %60 = vst [vmem:[#allocation2] sm:$0xff] 0.0
      %61 = vst [vmem:[#allocation3] sm:$0xff] 0.0
      %62 = vst [vmem:[#allocation4] sm:$0xff] 0.0
    $region25: #{tpu_custom_call.1} parent=1 // pred_fallthru
      _
    %v63 = vld [vmem:[#allocation6] sm:$0xff]
    %v64 = vld [vmem:[#allocation6 + $0x8] sm:$0xff]
    %v65 = vld [vmem:[#allocation9] sm:$0xff]
    %v66 = vld [vmem:[#allocation9 + $0x8] sm:$0xff]
    %s67 = sld [smem:[#allocation5]]
    %v68 = vstv %s67
    %vm69 = vcmp.ge.f32.partialorder %v63, %v68
    %vm70 = vcmp.ge.f32.partialorder %v64, %v68
    %vm71 = vcmp.ge.f32.partialorder %v65, 0.5
    %vm72 = vcmp.ge.f32.partialorder %v66, 0.5
    %vm73 = vmand %vm69, %vm71
    %vm74 = vmand %vm70, %vm72
    %v75 = vld [vmem:[#allocation3] sm:$0xff]
    %v76 = vsel %vm69, 1, 0
    %v77 = vsel %vm70, 1, 0
    %v78 = vcvt.s32.f32 %v76
    %v79 = vcvt.s32.f32 %v77
    %v80 = vadd.f32 %v78, %v79
    %v81 = vadd.f32 %v75, %v80
    %82 = vst [vmem:[#allocation3] sm:$0xff] %v81
    %v83 = vld [vmem:[#allocation4] sm:$0xff]
    %v84 = vsel %vm71, 1, 0
    %v85 = vsel %vm72, 1, 0
    %v86 = vcvt.s32.f32 %v84
    %v87 = vcvt.s32.f32 %v85
    %v88 = vadd.f32 %v86, %v87
    %v89 = vadd.f32 %v83, %v88
    %90 = vst [vmem:[#allocation4] sm:$0xff] %v89
    %v91 = vld [vmem:[#allocation2] sm:$0xff]
    %v92 = vsel %vm73, 1, 0
    %v93 = vsel %vm74, 1, 0
    %v94 = vcvt.s32.f32 %v92
    %v95 = vcvt.s32.f32 %v93
    %v96 = vadd.f32 %v94, %v95
    %v97 = vadd.f32 %v91, %v96
    %98 = vst [vmem:[#allocation2] sm:$0xff] %v97
    // Predicated region
    $region26: #{tpu_custom_call.1} parent=1 // pred_check
      %p99 = pneg %p56
    $region27: #{tpu_custom_call.1} parent=1 // pred_check_branch
      %101 = sbr.rel (%p99) target = $region29
    $region28: #{tpu_custom_call.1} parent=1 // pred_region
      %v102 = vld [vmem:[#allocation2] sm:$0xff]
      %103 = vst [vmem:[#allocation11] sm:$0xff] %v102
      %v104 = vld [vmem:[#allocation3] sm:$0xff]
      %105 = vst [vmem:[#allocation11 + $0x8] sm:$0xff] %v104
      %v106 = vld [vmem:[#allocation4] sm:$0xff]
      %107 = vst [vmem:[#allocation11 + $0x10] sm:$0xff] %v106
    $region29: #{tpu_custom_call.1} parent=1 // pred_fallthru
      _
    // Predicated region
    $region30: #{tpu_custom_call.1} parent=1 // pred_check
      _
    $region31: #{tpu_custom_call.1} parent=1 // pred_check_branch
      %109 = sbr.rel (0) target = $region33
    $region32: #{tpu_custom_call.1} parent=1 // pred_region
      %s111 = ssub.s32 384, 384
      %112 = vsyncadd [#allocation8], %s111
      %s113 = sshll.u32 [#allocation11], 4
      %s114 = int_to_ptr.vmem [resolvable:$true] %s113
      %119 = dma.vmem_to_hbm [thread:$0]  %s114, 384, %s3, [#allocation8], 128, 128, 8
    $region33: #{tpu_custom_call.1} parent=1 // pred_fallthru
      _
    // Predicated region
    $region34: #{tpu_custom_call.1} parent=1 // pred_check
      _
    $region35: #{tpu_custom_call.1} parent=1 // pred_check_branch
      %121 = sbr.rel (0) target = $region37
    $region36: #{tpu_custom_call.1} parent=1 // pred_region
      %122 = dma.done [#allocation8], 384
    $region37: #{tpu_custom_call.1} parent=1 // pred_fallthru
      _
    %123 = vsyncpa [#allocation7], 1
    %124 = vsyncpa [#allocation10], 1
    %125 = vsyncpa [#allocation8], 1

</llo_original>
